<compile_context>
chip_gen: v7x
topology: tpu7x:2x2x1
jax: 0.10.0
libtpu: 0.0.40
codegen_flags: <defaults>
</compile_context>

<pallas_src>
import jax
import jax.numpy as jnp
from jax.experimental import pallas as pl
from jax.experimental.pallas import tpu as pltpu

IN_DIM = 100        # logical input features (PyTorch Linear(100, 16))
IN_PAD = 128        # lane-aligned padded input features
HID_DIM = 16
OUT_DIM = 4
DEFAULT_TILE_B = 8192


def _round_up(n, m):
    return ((n + m - 1) // m) * m


def head_kernel(x_ref, w1_ref, b1_ref, w2_ref, b2_ref, o_ref):
    # First linear + ReLU (MXU matmul over the 128-wide padded K axis).
    h = jnp.dot(x_ref[...], w1_ref[...], preferred_element_type=jnp.float32)
    h = jnp.maximum(h + b1_ref[...], 0.0)
    # Second linear + ReLU (tiny; free filler on an otherwise idle MXU).
    y = jnp.dot(h, w2_ref[...], preferred_element_type=jnp.float32)
    y = jnp.maximum(y + b2_ref[...], 0.0)
    o_ref[...] = y.astype(o_ref.dtype)


def prepare_params(w1, b1, w2, b2):
    """One-time padding of w1 [100,16] -> [128,16] (rows of zeros)."""
    if w1.shape[0] != IN_PAD:
        w1 = jnp.pad(w1, ((0, IN_PAD - w1.shape[0]), (0, 0)))
    return w1, b1, w2, b2


def head_forward(x, w1_p, b1, w2, b2, tile_b=DEFAULT_TILE_B):
    """x: [B, 100] f32.  w1_p: [128,16] (pre-padded), b1: [1,16], w2: [16,4], b2: [1,4]."""
    B = x.shape[0]
    assert x.shape[1] == IN_DIM
    assert w1_p.shape == (IN_PAD, HID_DIM)

    # Pad the feature axis 100 -> 128 (zeros; numerically inert).
    x_p = jnp.pad(x, ((0, 0), (0, IN_PAD - IN_DIM)))

    # Pick the batch tile and pad B up to a multiple of it.
    tile_b = min(tile_b, _round_up(B, 8))
    b_pad = _round_up(B, tile_b)
    if b_pad != B:
        x_p = jnp.pad(x_p, ((0, b_pad - B), (0, 0)))

    grid = (b_pad // tile_b,)

    # Advisory cost: mem-bound (~8 flops/byte).
    flops = b_pad * (2 * IN_PAD * HID_DIM + 2 * HID_DIM * OUT_DIM)
    bytes_accessed = (
        b_pad * (IN_PAD + OUT_DIM) * 4
        + (IN_PAD * HID_DIM + HID_DIM + HID_DIM * OUT_DIM + OUT_DIM) * 4
    )

    out = pl.pallas_call(
        head_kernel,
        out_shape=jax.ShapeDtypeStruct((b_pad, OUT_DIM), x.dtype),
        grid=grid,
        in_specs=[
            pl.BlockSpec((tile_b, IN_PAD), lambda i: (i, 0)),      # x: tiled over batch
            pl.BlockSpec((IN_PAD, HID_DIM), lambda i: (0, 0)),     # w1: VMEM-resident
            pl.BlockSpec((1, HID_DIM), lambda i: (0, 0)),          # b1
            pl.BlockSpec((HID_DIM, OUT_DIM), lambda i: (0, 0)),    # w2
            pl.BlockSpec((1, OUT_DIM), lambda i: (0, 0)),          # b2
        ],
        out_specs=pl.BlockSpec((tile_b, OUT_DIM), lambda i: (i, 0)),
        compiler_params=pltpu.CompilerParams(
            dimension_semantics=("parallel",),
            vmem_limit_bytes=32 * 1024 * 1024,
        ),
        cost_estimate=pl.CostEstimate(
            flops=flops, transcendentals=0, bytes_accessed=bytes_accessed
        ),
    )(x_p, w1_p, b1, w2, b2)

    return out[:B]


def init_params(key):
    """Deterministic init mimicking nn.Linear default (uniform +/- 1/sqrt(fan_in)).
    Weights stored as [in, out] (transposed relative to PyTorch's [out, in])."""
    k1, k2, k3, k4 = jax.random.split(key, 4)
    bound1 = 1.0 / jnp.sqrt(IN_DIM)
    bound2 = 1.0 / jnp.sqrt(HID_DIM)
    w1 = jax.random.uniform(k1, (IN_DIM, HID_DIM), jnp.float32, -bound1, bound1)
    b1 = jax.random.uniform(k2, (1, HID_DIM), jnp.float32, -bound1, bound1)
    w2 = jax.random.uniform(k3, (HID_DIM, OUT_DIM), jnp.float32, -bound2, bound2)
    b2 = jax.random.uniform(k4, (1, OUT_DIM), jnp.float32, -bound2, bound2)
    return w1, b1, w2, b2


if __name__ == "__main__":
    key = jax.random.PRNGKey(0)
    kx, kp = jax.random.split(key)

    batch = 8
    x = jax.random.normal(kx, (batch, IN_DIM), jnp.float32)
    w1, b1, w2, b2 = init_params(kp)
    w1_p, b1, w2, b2 = prepare_params(w1, b1, w2, b2)

    out = head_forward(x, w1_p, b1, w2, b2)
    out = jax.block_until_ready(out)

    # Reference check in plain JAX (unpadded weights).
    ref = jnp.maximum(x @ w1 + b1, 0.0)
    ref = jnp.maximum(ref @ w2 + b2, 0.0)
    assert out.shape == (batch, OUT_DIM)
    assert jnp.allclose(out, ref, atol=1e-4, rtol=1e-4)

    print("KERNEL_OK")
</pallas_src>

<mosaic_0001>
module attributes {stable_mosaic.version = 11 : i64} {
  func.func @head_kernel(%arg0: i32, %arg1: memref<8x128xf32, #tpu.memory_space<vmem>>, %arg2: memref<128x16xf32, #tpu.memory_space<vmem>>, %arg3: memref<1x16xf32, #tpu.memory_space<vmem>>, %arg4: memref<16x4xf32, #tpu.memory_space<vmem>>, %arg5: memref<1x4xf32, #tpu.memory_space<vmem>>, %arg6: memref<8x4xf32, #tpu.memory_space<vmem>>) attributes {dimension_semantics = [#tpu.dimension_semantics<parallel>], iteration_bounds = array<i64: 1>, scalar_prefetch = 0 : i64, scratch_operands = 0 : i64, tpu.core_type = #tpu.core_type<tc>, window_params = [{transform_indices = @transform_0, window_bounds = array<i64: 8, 128>}, {pipeline_mode = #tpu.pipeline_mode<synchronous>, transform_indices = @transform_1, window_bounds = array<i64: 128, 16>}, {pipeline_mode = #tpu.pipeline_mode<synchronous>, transform_indices = @transform_2, window_bounds = array<i64: 1, 16>}, {pipeline_mode = #tpu.pipeline_mode<synchronous>, transform_indices = @transform_3, window_bounds = array<i64: 16, 4>}, {pipeline_mode = #tpu.pipeline_mode<synchronous>, transform_indices = @transform_4, window_bounds = array<i64: 1, 4>}, {transform_indices = @transform_5, window_bounds = array<i64: 8, 4>}]} {
    %c0 = arith.constant 0 : index
    %c0_0 = arith.constant 0 : index
    %0 = vector.load %arg1[%c0, %c0_0] : memref<8x128xf32, #tpu.memory_space<vmem>>, vector<8x128xf32>
    %c0_1 = arith.constant 0 : index
    %c0_2 = arith.constant 0 : index
    %1 = vector.load %arg2[%c0_1, %c0_2] : memref<128x16xf32, #tpu.memory_space<vmem>>, vector<128x16xf32>
    %cst = arith.constant dense<0.000000e+00> : vector<8x16xf32>
    %2 = tpu.matmul %0, %1, %cst {dimension_numbers = #tpu.dot_dimension_numbers<[1], [0], [0], [1], [0, 0, 1, 1], [], []>} : vector<8x128xf32>, vector<128x16xf32>, vector<8x16xf32> -> vector<8x16xf32>
    %c0_3 = arith.constant 0 : index
    %c0_4 = arith.constant 0 : index
    %3 = vector.load %arg3[%c0_3, %c0_4] : memref<1x16xf32, #tpu.memory_space<vmem>>, vector<1x16xf32>
    %4 = vector.broadcast %3 : vector<1x16xf32> to vector<8x16xf32>
    %5 = arith.addf %2, %4 : vector<8x16xf32>
    %cst_5 = arith.constant 0.000000e+00 : f32
    %6 = vector.broadcast %cst_5 : f32 to vector<8x16xf32>
    %7 = arith.maximumf %5, %6 : vector<8x16xf32>
    %c0_6 = arith.constant 0 : index
    %c0_7 = arith.constant 0 : index
    %8 = vector.load %arg4[%c0_6, %c0_7] : memref<16x4xf32, #tpu.memory_space<vmem>>, vector<16x4xf32>
    %cst_8 = arith.constant dense<0.000000e+00> : vector<8x4xf32>
    %9 = tpu.matmul %7, %8, %cst_8 {dimension_numbers = #tpu.dot_dimension_numbers<[1], [0], [0], [1], [0, 0, 1, 1], [], []>} : vector<8x16xf32>, vector<16x4xf32>, vector<8x4xf32> -> vector<8x4xf32>
    %c0_9 = arith.constant 0 : index
    %c0_10 = arith.constant 0 : index
    %10 = vector.load %arg5[%c0_9, %c0_10] : memref<1x4xf32, #tpu.memory_space<vmem>>, vector<1x4xf32>
    %11 = vector.broadcast %10 : vector<1x4xf32> to vector<8x4xf32>
    %12 = arith.addf %9, %11 : vector<8x4xf32>
    %cst_11 = arith.constant 0.000000e+00 : f32
    %13 = vector.broadcast %cst_11 : f32 to vector<8x4xf32>
    %14 = arith.maximumf %12, %13 : vector<8x4xf32>
    %c0_12 = arith.constant 0 : index
    %c0_13 = arith.constant 0 : index
    %15 = vector.load %arg6[%c0_12, %c0_13] : memref<8x4xf32, #tpu.memory_space<vmem>>, vector<8x4xf32>
    tpu.vector_store %arg6[%c0_12, %c0_13], %14 {strides = array<i32>} : memref<8x4xf32, #tpu.memory_space<vmem>>, vector<8x4xf32>,
    return
  }
  func.func @transform_0(%arg0: i32) -> (i32, i32) {
    %c0_i32 = arith.constant 0 : i32
    %c0_i32_0 = arith.constant 0 : i32
    return %arg0, %c0_i32 : i32, i32
  }
  func.func @transform_1(%arg0: i32) -> (i32, i32) {
    %c0_i32 = arith.constant 0 : i32
    %c0_i32_0 = arith.constant 0 : i32
    %c0_i32_1 = arith.constant 0 : i32
    return %c0_i32, %c0_i32_0 : i32, i32
  }
  func.func @transform_2(%arg0: i32) -> (i32, i32) {
    %c0_i32 = arith.constant 0 : i32
    %c0_i32_0 = arith.constant 0 : i32
    %c0_i32_1 = arith.constant 0 : i32
    return %c0_i32, %c0_i32_0 : i32, i32
  }
  func.func @transform_3(%arg0: i32) -> (i32, i32) {
    %c0_i32 = arith.constant 0 : i32
    %c0_i32_0 = arith.constant 0 : i32
    %c0_i32_1 = arith.constant 0 : i32
    return %c0_i32, %c0_i32_0 : i32, i32
  }
  func.func @transform_4(%arg0: i32) -> (i32, i32) {
    %c0_i32 = arith.constant 0 : i32
    %c0_i32_0 = arith.constant 0 : i32
    %c0_i32_1 = arith.constant 0 : i32
    return %c0_i32, %c0_i32_0 : i32, i32
  }
  func.func @transform_5(%arg0: i32) -> (i32, i32) {
    %c0_i32 = arith.constant 0 : i32
    %c0_i32_0 = arith.constant 0 : i32
    return %arg0, %c0_i32 : i32, i32
  }
}

</mosaic_0001>

<llo_original>
// kernel: tpu_custom_call.1
$region0: #{tpu_custom_call.1}
  #allocation0 [shape = 'u32[]', space=smem, size = 0x4, offset = 0x4, fixed_abs, tag = 'smem constant byte address 0x4 - core index']
  #allocation1 [shape = 'u32[144,128]{1,0:T(1,128)}', space=vmem, size = 0x12000, scoped, tag = 'internal scratch']
  %s0 = inlined_call_operand.vmem [shape: f32[8,128], index: 0, kind: input, shape index: {}]
  %s1 = inlined_call_operand.vmem [shape: f32[128,16], index: 1, kind: input, shape index: {}]
  %s2 = inlined_call_operand.vmem [shape: f32[1,16], index: 2, kind: input, shape index: {}]
  %s3 = inlined_call_operand.vmem [shape: f32[16,4], index: 3, kind: input, shape index: {}]
  %s4 = inlined_call_operand.vmem [shape: f32[1,4], index: 4, kind: input, shape index: {}]
  %s5 = inlined_call_operand.vmem [shape: f32[8,4], index: 5, kind: output, shape index: {}]
  %s6 = sld [smem:[#allocation0]]
  $region30: #{tpu_custom_call.1} parent=0
    _
  %s8 = ssub.s32 1, %s6
  %s9 = scalar_select 0, %s8, %s6
  // Predicated region
  $region2: #{tpu_custom_call.1} parent=0 // pred_check
    _
  $region3: #{tpu_custom_call.1} parent=0 // pred_check_branch
    %11 = sbr.rel (0) target = $region5
  $region4: #{tpu_custom_call.1} parent=0 // pred_region
    _
  $region5: #{tpu_custom_call.1} parent=0 // pred_fallthru
    _
  // Predicated region
  $region6: #{tpu_custom_call.1} parent=0 // pred_check
    _
  $region7: #{tpu_custom_call.1} parent=0 // pred_check_branch
    %13 = sbr.rel (0) target = $region9
  $region8: #{tpu_custom_call.1} parent=0 // pred_region
    _
  $region9: #{tpu_custom_call.1} parent=0 // pred_fallthru
    _
  // Predicated region
  $region10: #{tpu_custom_call.1} parent=0 // pred_check
    _
  $region11: #{tpu_custom_call.1} parent=0 // pred_check_branch
    %15 = sbr.rel (0) target = $region13
  $region12: #{tpu_custom_call.1} parent=0 // pred_region
    _
  $region13: #{tpu_custom_call.1} parent=0 // pred_fallthru
    _
  // Predicated region
  $region14: #{tpu_custom_call.1} parent=0 // pred_check
    _
  $region15: #{tpu_custom_call.1} parent=0 // pred_check_branch
    %17 = sbr.rel (0) target = $region17
  $region16: #{tpu_custom_call.1} parent=0 // pred_region
    _
  $region17: #{tpu_custom_call.1} parent=0 // pred_fallthru
    _
  // Predicated region
  $region18: #{tpu_custom_call.1} parent=0 // pred_check
    _
  $region19: #{tpu_custom_call.1} parent=0 // pred_check_branch
    %19 = sbr.rel (0) target = $region21
  $region20: #{tpu_custom_call.1} parent=0 // pred_region
    _
  $region21: #{tpu_custom_call.1} parent=0 // pred_fallthru
    _
  %v20 = vld [vmem:[%s0] sm:$0xff]
  %v21 = vld [vmem:[%s1] sm:$0xff]
  %v22 = vld [vmem:[%s1 + $0x8] sm:$0xff]
  %v23 = vld [vmem:[%s1 + $0x10] sm:$0xff]
  %v24 = vld [vmem:[%s1 + $0x18] sm:$0xff]
  %v25 = vld [vmem:[%s1 + $0x20] sm:$0xff]
  %v26 = vld [vmem:[%s1 + $0x28] sm:$0xff]
  %v27 = vld [vmem:[%s1 + $0x30] sm:$0xff]
  %v28 = vld [vmem:[%s1 + $0x38] sm:$0xff]
  %v29 = vld [vmem:[%s1 + $0x40] sm:$0xff]
  %v30 = vld [vmem:[%s1 + $0x48] sm:$0xff]
  %v31 = vld [vmem:[%s1 + $0x50] sm:$0xff]
  %v32 = vld [vmem:[%s1 + $0x58] sm:$0xff]
  %v33 = vld [vmem:[%s1 + $0x60] sm:$0xff]
  %v34 = vld [vmem:[%s1 + $0x68] sm:$0xff]
  %v35 = vld [vmem:[%s1 + $0x70] sm:$0xff]
  %v36 = vld [vmem:[%s1 + $0x78] sm:$0xff]
  %v37 = vld [vmem:[%s2] sm:$0x1]
  %v39 = vlaneseq
  %v40 = vshrl.u32 %v39, 7
  %v41 = vsub.s32 0, %v40
  %v42 = vrot.slane %v37, %v41
  %44 = vmatprep.subr.mxu0 0.0
  %45 = vmatpush1.msra.mxu0 %v21
  %46 = vmatprep.subr.mxu0 0.0
  %47 = vmatpush1.msra.mxu0 %v22
  %48 = vmatprep.subr.mxu0 0.0
  %49 = vmatpush1.msra.mxu0 %v23
  %50 = vmatprep.subr.mxu0 0.0
  %51 = vmatpush1.msra.mxu0 %v24
  %52 = vmatprep.subr.mxu0 0.0
  %53 = vmatpush1.msra.mxu0 %v25
  %54 = vmatprep.subr.mxu0 0.0
  %55 = vmatpush1.msra.mxu0 %v26
  %56 = vmatprep.subr.mxu0 0.0
  %57 = vmatpush1.msra.mxu0 %v27
  %58 = vmatprep.subr.mxu0 0.0
  %59 = vmatpush1.msra.mxu0 %v28
  %60 = vmatprep.subr.mxu0 0.0
  %61 = vmatpush1.msra.mxu0 %v29
  %62 = vmatprep.subr.mxu0 0.0
  %63 = vmatpush1.msra.mxu0 %v30
  %64 = vmatprep.subr.mxu0 0.0
  %65 = vmatpush1.msra.mxu0 %v31
  %66 = vmatprep.subr.mxu0 0.0
  %67 = vmatpush1.msra.mxu0 %v32
  %68 = vmatprep.subr.mxu0 0.0
  %69 = vmatpush1.msra.mxu0 %v33
  %70 = vmatprep.subr.mxu0 0.0
  %71 = vmatpush1.msra.mxu0 %v34
  %72 = vmatprep.subr.mxu0 0.0
  %73 = vmatpush1.msra.mxu0 %v35
  %74 = vmatprep.subr.mxu0 0.0
  %75 = vmatpush1.msra.mxu0 %v36
  %76 = vmatprep.subr.mxu0 0.0
  %77 = vmatpush1.msra.mxu0 0.0
  %78 = vmatprep.subr.mxu0 0.0
  %79 = vmatpush1.msra.mxu0 0.0
  %80 = vmatprep.subr.mxu0 0.0
  %81 = vmatpush1.msra.mxu0 0.0
  %82 = vmatprep.subr.mxu0 0.0
  %83 = vmatpush1.msra.mxu0 0.0
  %84 = vmatprep.subr.mxu0 0.0
  %85 = vmatpush1.msra.mxu0 0.0
  %86 = vmatprep.subr.mxu0 0.0
  %87 = vmatpush1.msra.mxu0 0.0
  %88 = vmatprep.subr.mxu0 0.0
  %89 = vmatpush1.msra.mxu0 0.0
  %90 = vmatprep.subr.mxu0 0.0
  %91 = vmatpush1.msra.mxu0 0.0
  %92 = vmatprep.subr.mxu0 0.0
  %93 = vmatpush1.msra.mxu0 0.0
  %94 = vmatprep.subr.mxu0 0.0
  %95 = vmatpush1.msra.mxu0 0.0
  %96 = vmatprep.subr.mxu0 0.0
  %97 = vmatpush1.msra.mxu0 0.0
  %98 = vmatprep.subr.mxu0 0.0
  %99 = vmatpush1.msra.mxu0 0.0
  %100 = vmatprep.subr.mxu0 0.0
  %101 = vmatpush1.msra.mxu0 0.0
  %102 = vmatprep.subr.mxu0 0.0
  %103 = vmatpush1.msra.mxu0 0.0
  %104 = vmatprep.subr.mxu0 0.0
  %105 = vmatpush1.msra.mxu0 0.0
  %106 = vmatprep.subr.mxu0 0.0
  %107 = vmatpush1.msra.mxu0 0.0
  %108 = vmatprep.mubr.f32.mxu0 0.0
  %109 = vmatmul.mubr.f32.gmra.mrb[0].mxu0 %v20
  %v110 = vpop.f32.mrb[0].mxu0
  %v111 = vadd.f32 %v42, %v110
  %v112 = vpop.f32.mrb[0].mxu0
  %113 = vdwg.mxu0
  %v114 = vmax.f32 %v111, 0.0
  %v115 = vld [vmem:[%s3] sm:$0xff]
  %v116 = vld [vmem:[%s3 + $0x8] sm:$0xff]
  %v117 = vld [vmem:[%s4] sm:$0x1]
  %v119 = vlaneseq
  %v120 = vshrl.u32 %v119, 7
  %v121 = vsub.s32 0, %v120
  %v122 = vrot.slane %v117, %v121
  %vm124 = vcmask 130048
  %v126 = vsel %vm124, %v114, 0
  %128 = vmatprep.subr.mxu0 0.0
  %129 = vmatpush1.msra.mxu0 %v115
  %130 = vmatprep.subr.mxu0 0.0
  %131 = vmatpush1.msra.mxu0 %v116
  %132 = vmatprep.subr.mxu0 0.0
  %133 = vmatpush1.msra.mxu0 0.0
  %134 = vmatprep.subr.mxu0 0.0
  %135 = vmatpush1.msra.mxu0 0.0
  %136 = vmatprep.subr.mxu0 0.0
  %137 = vmatpush1.msra.mxu0 0.0
  %138 = vmatprep.subr.mxu0 0.0
  %139 = vmatpush1.msra.mxu0 0.0
  %140 = vmatprep.subr.mxu0 0.0
  %141 = vmatpush1.msra.mxu0 0.0
  %142 = vmatprep.subr.mxu0 0.0
  %143 = vmatpush1.msra.mxu0 0.0
  %144 = vmatprep.subr.mxu0 0.0
  %145 = vmatpush1.msra.mxu0 0.0
  %146 = vmatprep.subr.mxu0 0.0
  %147 = vmatpush1.msra.mxu0 0.0
  %148 = vmatprep.subr.mxu0 0.0
  %149 = vmatpush1.msra.mxu0 0.0
  %150 = vmatprep.subr.mxu0 0.0
  %151 = vmatpush1.msra.mxu0 0.0
  %152 = vmatprep.subr.mxu0 0.0
  %153 = vmatpush1.msra.mxu0 0.0
  %154 = vmatprep.subr.mxu0 0.0
  %155 = vmatpush1.msra.mxu0 0.0
  %156 = vmatprep.subr.mxu0 0.0
  %157 = vmatpush1.msra.mxu0 0.0
  %158 = vmatprep.subr.mxu0 0.0
  %159 = vmatpush1.msra.mxu0 0.0
  %160 = vmatprep.subr.mxu0 0.0
  %161 = vmatpush1.msra.mxu0 0.0
  %162 = vmatprep.subr.mxu0 0.0
  %163 = vmatpush1.msra.mxu0 0.0
  %164 = vmatprep.subr.mxu0 0.0
  %165 = vmatpush1.msra.mxu0 0.0
  %166 = vmatprep.subr.mxu0 0.0
  %167 = vmatpush1.msra.mxu0 0.0
  %168 = vmatprep.subr.mxu0 0.0
  %169 = vmatpush1.msra.mxu0 0.0
  %170 = vmatprep.subr.mxu0 0.0
  %171 = vmatpush1.msra.mxu0 0.0
  %172 = vmatprep.subr.mxu0 0.0
  %173 = vmatpush1.msra.mxu0 0.0
  %174 = vmatprep.subr.mxu0 0.0
  %175 = vmatpush1.msra.mxu0 0.0
  %176 = vmatprep.subr.mxu0 0.0
  %177 = vmatpush1.msra.mxu0 0.0
  %178 = vmatprep.subr.mxu0 0.0
  %179 = vmatpush1.msra.mxu0 0.0
  %180 = vmatprep.subr.mxu0 0.0
  %181 = vmatpush1.msra.mxu0 0.0
  %182 = vmatprep.subr.mxu0 0.0
  %183 = vmatpush1.msra.mxu0 0.0
  %184 = vmatprep.subr.mxu0 0.0
  %185 = vmatpush1.msra.mxu0 0.0
  %186 = vmatprep.subr.mxu0 0.0
  %187 = vmatpush1.msra.mxu0 0.0
  %188 = vmatprep.subr.mxu0 0.0
  %189 = vmatpush1.msra.mxu0 0.0
  %190 = vmatprep.subr.mxu0 0.0
  %191 = vmatpush1.msra.mxu0 0.0
  %192 = vmatprep.mubr.f32.mxu0 0.0
  %193 = vmatmul.mubr.f32.gmra.mrb[0].mxu0 %v126
  %v194 = vpop.f32.mrb[0].mxu0
  %v195 = vadd.f32 %v122, %v194
  %v196 = vpop.f32.mrb[0].mxu0
  %197 = vdwg.mxu0
  %v198 = vmax.f32 %v195, 0.0
  %vm199 = vcmask 31744
  %200 = vst.msk [vmem:[%s5] sm:$0xff] %vm199, %v198
  // Predicated region
  $region22: #{tpu_custom_call.1} parent=0 // pred_check
    _
  $region23: #{tpu_custom_call.1} parent=0 // pred_check_branch
    %202 = sbr.rel (0) target = $region25
  $region24: #{tpu_custom_call.1} parent=0 // pred_region
    _
  $region25: #{tpu_custom_call.1} parent=0 // pred_fallthru
    _
  // Predicated region
  $region26: #{tpu_custom_call.1} parent=0 // pred_check
    _
  $region27: #{tpu_custom_call.1} parent=0 // pred_check_branch
    %204 = sbr.rel (0) target = $region29
  $region28: #{tpu_custom_call.1} parent=0 // pred_region
    _
  $region29: #{tpu_custom_call.1} parent=0 // pred_fallthru
    _

</llo_original>
